<compile_context>
chip_gen: v5e
topology: v5e:2x2
jax: 0.10.0
libtpu: 0.0.40
codegen_flags: <defaults>
</compile_context>

<pallas_src>
import jax
import jax.numpy as jnp
from jax.experimental import pallas as pl
from jax.experimental.pallas import tpu as pltpu

_EPS = 1e-5
_LANE = 128
_ROW_PACK = 16                      # bf16 packs 16 rows per vreg
_DEFAULT_ROW_TILE = 1024            # multiple of 256 (v6e/v7x MXU) and of 16
_VMEM_LIMIT_BYTES = 48 * 1024 * 1024  # > 16/32 MiB scoped defaults, < v7x 64 MiB physical


def _round_up(x, m):
    return pl.cdiv(x, m) * m


def _pad2(a, rows, cols):
    return jnp.pad(a, ((0, rows - a.shape[0]), (0, cols - a.shape[1])))


def _make_mlp_kernel(n_real):
    inv_n = 1.0 / float(n_real)

    def kernel(x_ref, w1_ref, g1_ref, bt1_ref, w2_ref, b2_ref, o_ref,
               sum_ref, sumsq_ref):
        phase = pl.program_id(0)   # 0 = batch statistics, 1 = normalize + layer 2
        r = pl.program_id(1)       # row tile index

        # ---- pass 1: accumulate per-column sum / sum-of-squares of z1 ----
        @pl.when(phase == 0)
        def _stats_pass():
            @pl.when(r == 0)
            def _init():
                sum_ref[...] = jnp.zeros_like(sum_ref)
                sumsq_ref[...] = jnp.zeros_like(sumsq_ref)

            # No layer-1 bias: it cancels exactly under batch-mean subtraction, and
            # zero-padded rows then contribute exactly 0 to both accumulators.
            z1 = jnp.dot(x_ref[...], w1_ref[...],
                         preferred_element_type=jnp.float32)
            sum_ref[...] += jnp.sum(z1, axis=0, keepdims=True)
            sumsq_ref[...] += jnp.sum(z1 * z1, axis=0, keepdims=True)

        # ---- pass 2: recompute z1, folded BN/ReLU FMA, linear output ----
        @pl.when(phase == 1)
        def _apply_pass():
            z1 = jnp.dot(x_ref[...], w1_ref[...],
                         preferred_element_type=jnp.float32)
            mu = sum_ref[...] * inv_n
            var = jnp.maximum(sumsq_ref[...] * inv_n - mu * mu, 0.0)  # biased var
            scale = g1_ref[...] * jax.lax.rsqrt(var + _EPS)           # EUP rsqrt
            shift = bt1_ref[...] - mu * scale
            h1 = jnp.maximum(z1 * scale + shift, 0.0)                 # ReLU

            z2 = jnp.dot(h1.astype(jnp.bfloat16), w2_ref[...],
                         preferred_element_type=jnp.float32) + b2_ref[...]
            o_ref[...] = z2.astype(o_ref.dtype)

    return kernel


def mlp_forward(x, w1, b1, g1, bt1, w2, b2, *,
                out_dtype=jnp.float32, row_tile=_DEFAULT_ROW_TILE):
    """2-layer GIN MLP forward. x:[N,Din]; returns [N,Dout] in `out_dtype`."""
    del b1  # exactly cancelled by the batch-mean subtraction of training-mode BatchNorm1d

    n, d_in = x.shape
    d_hid = w1.shape[1]
    d_out = w2.shape[1]

    # Lane-dense (128) feature padding; 16-row (bf16 vreg-pack) row padding.
    di_p = _round_up(d_in, _LANE)
    dh_p = _round_up(d_hid, _LANE)
    do_p = _round_up(d_out, _LANE)

    row_tile = max(_ROW_PACK, _round_up(row_tile, _ROW_PACK))
    n16 = _round_up(n, _ROW_PACK)
    tm = n16 if n16 <= row_tile else row_tile
    n_pad = _round_up(n16, tm)
    num_row_tiles = n_pad // tm

    # Pad + cast (MXU operands to bf16 — halves their HBM->VMEM bytes; BN params f32).
    xp = _pad2(x.astype(jnp.float32), n_pad, di_p).astype(jnp.bfloat16)
    w1p = _pad2(w1.astype(jnp.float32), di_p, dh_p).astype(jnp.bfloat16)
    w2p = _pad2(w2.astype(jnp.float32), dh_p, do_p).astype(jnp.bfloat16)
    g1p = _pad2(g1.reshape(1, -1).astype(jnp.float32), 1, dh_p)   # padded gamma = 0
    bt1p = _pad2(bt1.reshape(1, -1).astype(jnp.float32), 1, dh_p)
    b2p = _pad2(b2.reshape(1, -1).astype(jnp.float32), 1, do_p)

    in_specs = [
        pl.BlockSpec((tm, di_p), lambda p, r: (r, 0)),      # x: re-read each phase
        pl.BlockSpec((di_p, dh_p), lambda p, r: (0, 0)),    # w1 (constant block)
        pl.BlockSpec((1, dh_p), lambda p, r: (0, 0)),       # gamma
        pl.BlockSpec((1, dh_p), lambda p, r: (0, 0)),       # beta
        pl.BlockSpec((dh_p, do_p), lambda p, r: (0, 0)),    # w2 (constant block)
        pl.BlockSpec((1, do_p), lambda p, r: (0, 0)),       # b2
    ]
    # phase 0 -> block 0 for every r (never changes => never flushed during stats pass);
    # phase 1 -> block r (each output tile written exactly once).
    out_spec = pl.BlockSpec((tm, do_p), lambda p, r: (p * r, 0))

    out_padded = pl.pallas_call(
        _make_mlp_kernel(n),
        out_shape=jax.ShapeDtypeStruct((n_pad, do_p), out_dtype),
        grid_spec=pltpu.PrefetchScalarGridSpec(
            num_scalar_prefetch=0,
            grid=(2, num_row_tiles),
            in_specs=in_specs,
            out_specs=out_spec,
            scratch_shapes=[pltpu.VMEM((1, dh_p), jnp.float32),   # column sums
                            pltpu.VMEM((1, dh_p), jnp.float32)],  # column sum-of-squares
        ),
        compiler_params=pltpu.CompilerParams(
            # Stats scratch carries across both axes -> both must stay sequential.
            dimension_semantics=("arbitrary", "arbitrary"),
            vmem_limit_bytes=_VMEM_LIMIT_BYTES),
    )(xp, w1p, g1p, bt1p, w2p, b2p)

    return out_padded[:n, :d_out]


# ------------------------- references -------------------------

def reference_f32(x, w1, b1, g1, bt1, w2, b2):
    """Exact PyTorch MLP(num_layers=2) forward in f32 (BatchNorm1d train mode)."""
    z1 = x @ w1 + b1
    mu = jnp.mean(z1, axis=0, keepdims=True)
    var = jnp.mean((z1 - mu) ** 2, axis=0, keepdims=True)
    h = jnp.maximum((z1 - mu) / jnp.sqrt(var + _EPS) * g1 + bt1, 0.0)
    return h @ w2 + b2


def reference_bf16_mxu(x, w1, g1, bt1, w2, b2):
    """Same forward, mimicking the kernel: bias-free layer 1, bf16 MXU inputs, f32 math."""
    z1 = jnp.dot(x.astype(jnp.bfloat16), w1.astype(jnp.bfloat16),
                 preferred_element_type=jnp.float32)
    mu = jnp.mean(z1, axis=0, keepdims=True)
    var = jnp.mean((z1 - mu) ** 2, axis=0, keepdims=True)
    h = jnp.maximum((z1 - mu) / jnp.sqrt(var + _EPS) * g1 + bt1, 0.0)
    return jnp.dot(h.astype(jnp.bfloat16), w2.astype(jnp.bfloat16),
                   preferred_element_type=jnp.float32) + b2


if __name__ == "__main__":
    # Small node-feature problem: 16 nodes, input_dim=32, hidden_dim=64, output_dim=32.
    # NOTE: tile/pipeline decisions are sized for realistic GIN node counts (>=10k rows);
    # this harness is only a correctness check, not a benchmark.
    N, D_IN, D_HID, D_OUT = 16, 32, 64, 32

    key = jax.random.PRNGKey(0)
    kx, kw1, kb1, kw2, kb2 = jax.random.split(key, 5)

    x = jax.random.normal(kx, (N, D_IN), dtype=jnp.float32)

    # Linear weights/biases; BN gamma=1, beta=0 (nn.BatchNorm1d default init).
    w1 = jax.random.normal(kw1, (D_IN, D_HID), dtype=jnp.float32) * 0.1
    b1 = jax.random.normal(kb1, (D_HID,), dtype=jnp.float32) * 0.1
    g1 = jnp.ones((D_HID,), dtype=jnp.float32)
    bt1 = jnp.zeros((D_HID,), dtype=jnp.float32)
    w2 = jax.random.normal(kw2, (D_HID, D_OUT), dtype=jnp.float32) * 0.1
    b2 = jax.random.normal(kb2, (D_OUT,), dtype=jnp.float32) * 0.1

    # --- single-row-tile path (grid = (2, 1)) ---
    out = jax.block_until_ready(mlp_forward(x, w1, b1, g1, bt1, w2, b2))
    assert out.shape == (N, D_OUT) and out.dtype == jnp.float32

    ref_bf16 = reference_bf16_mxu(x, w1, g1, bt1, w2, b2)
    assert jnp.allclose(out, ref_bf16, atol=5e-3, rtol=5e-3), "mismatch vs bf16-MXU ref"
    ref_f32 = reference_f32(x, w1, b1, g1, bt1, w2, b2)
    assert jnp.allclose(out, ref_f32, atol=5e-2, rtol=5e-2), "mismatch vs f32 ref"

    # --- multi-row-tile path: exercises tiled stats accumulation + padded last tile ---
    N2 = 50
    x2 = jax.random.normal(jax.random.PRNGKey(1), (N2, D_IN), dtype=jnp.float32)
    out2 = jax.block_until_ready(
        mlp_forward(x2, w1, b1, g1, bt1, w2, b2, row_tile=32))
    assert out2.shape == (N2, D_OUT)
    ref2_bf16 = reference_bf16_mxu(x2, w1, g1, bt1, w2, b2)
    assert jnp.allclose(out2, ref2_bf16, atol=5e-3, rtol=5e-3), "tiled mismatch vs bf16-MXU ref"
    ref2_f32 = reference_f32(x2, w1, b1, g1, bt1, w2, b2)
    assert jnp.allclose(out2, ref2_f32, atol=5e-2, rtol=5e-2), "tiled mismatch vs f32 ref"

    # --- bf16 output variant (halves HBM write traffic for bandwidth-bound large N) ---
    out_bf16 = jax.block_until_ready(
        mlp_forward(x, w1, b1, g1, bt1, w2, b2, out_dtype=jnp.bfloat16))
    assert out_bf16.dtype == jnp.bfloat16
    assert jnp.allclose(out_bf16.astype(jnp.float32), ref_bf16, atol=2e-2, rtol=2e-2), \
        "mismatch in bf16-output variant"

    print("KERNEL_OK")
</pallas_src>

<mosaic_0001>
module attributes {stable_mosaic.version = 11 : i64} {
  func.func @kernel(%arg0: i32, %arg1: i32, %arg2: memref<16x128xbf16, #tpu.memory_space<vmem>>, %arg3: memref<128x128xbf16, #tpu.memory_space<vmem>>, %arg4: memref<1x128xf32, #tpu.memory_space<vmem>>, %arg5: memref<1x128xf32, #tpu.memory_space<vmem>>, %arg6: memref<128x128xbf16, #tpu.memory_space<vmem>>, %arg7: memref<1x128xf32, #tpu.memory_space<vmem>>, %arg8: memref<16x128xf32, #tpu.memory_space<vmem>>, %arg9: memref<1x128xf32, #tpu.memory_space<vmem>>, %arg10: memref<1x128xf32, #tpu.memory_space<vmem>>) attributes {dimension_semantics = [#tpu.dimension_semantics<arbitrary>, #tpu.dimension_semantics<arbitrary>], iteration_bounds = array<i64: 2, 1>, scalar_prefetch = 0 : i64, scratch_operands = 2 : i64, tpu.core_type = #tpu.core_type<tc>, window_params = [{transform_indices = @transform_0, window_bounds = array<i64: 16, 128>}, {pipeline_mode = #tpu.pipeline_mode<synchronous>, transform_indices = @transform_1, window_bounds = array<i64: 128, 128>}, {pipeline_mode = #tpu.pipeline_mode<synchronous>, transform_indices = @transform_2, window_bounds = array<i64: 1, 128>}, {pipeline_mode = #tpu.pipeline_mode<synchronous>, transform_indices = @transform_3, window_bounds = array<i64: 1, 128>}, {pipeline_mode = #tpu.pipeline_mode<synchronous>, transform_indices = @transform_4, window_bounds = array<i64: 128, 128>}, {pipeline_mode = #tpu.pipeline_mode<synchronous>, transform_indices = @transform_5, window_bounds = array<i64: 1, 128>}, {transform_indices = @transform_6, window_bounds = array<i64: 16, 128>}]} {
    %c0_i32 = arith.constant 0 : i32
    %0 = arith.cmpi eq, %arg0, %c0_i32 : i32
    %1 = arith.extui %0 : i1 to i32
    %c0_i32_0 = arith.constant 0 : i32
    %2 = arith.cmpi ne, %1, %c0_i32_0 : i32
    scf.if %2 {
      %c0_i32_2 = arith.constant 0 : i32
      %6 = arith.cmpi eq, %arg1, %c0_i32_2 : i32
      %7 = arith.extui %6 : i1 to i32
      %c0_i32_3 = arith.constant 0 : i32
      %8 = arith.cmpi ne, %7, %c0_i32_3 : i32
      scf.if %8 {
        %cst_17 = arith.constant 0.000000e+00 : f32
        %23 = vector.broadcast %cst_17 : f32 to vector<1x128xf32>
        %c0_18 = arith.constant 0 : index
        %c0_19 = arith.constant 0 : index
        %24 = vector.load %arg9[%c0_18, %c0_19] : memref<1x128xf32, #tpu.memory_space<vmem>>, vector<1x128xf32>
        tpu.vector_store %arg9[%c0_18, %c0_19], %23 {strides = array<i32>} : memref<1x128xf32, #tpu.memory_space<vmem>>, vector<1x128xf32>,
        %cst_20 = arith.constant 0.000000e+00 : f32
        %25 = vector.broadcast %cst_20 : f32 to vector<1x128xf32>
        %c0_21 = arith.constant 0 : index
        %c0_22 = arith.constant 0 : index
        %26 = vector.load %arg10[%c0_21, %c0_22] : memref<1x128xf32, #tpu.memory_space<vmem>>, vector<1x128xf32>
        tpu.vector_store %arg10[%c0_21, %c0_22], %25 {strides = array<i32>} : memref<1x128xf32, #tpu.memory_space<vmem>>, vector<1x128xf32>,
      } else {
      }
      %c0 = arith.constant 0 : index
      %c0_4 = arith.constant 0 : index
      %9 = vector.load %arg2[%c0, %c0_4] : memref<16x128xbf16, #tpu.memory_space<vmem>>, vector<16x128xbf16>
      %c0_5 = arith.constant 0 : index
      %c0_6 = arith.constant 0 : index
      %10 = vector.load %arg3[%c0_5, %c0_6] : memref<128x128xbf16, #tpu.memory_space<vmem>>, vector<128x128xbf16>
      %cst = arith.constant dense<0.000000e+00> : vector<16x128xf32>
      %11 = tpu.matmul %9, %10, %cst {dimension_numbers = #tpu.dot_dimension_numbers<[1], [0], [0], [1], [0, 0, 1, 1], [], []>} : vector<16x128xbf16>, vector<128x128xbf16>, vector<16x128xf32> -> vector<16x128xf32>
      %c0_7 = arith.constant 0 : index
      %c0_8 = arith.constant 0 : index
      %12 = vector.load %arg9[%c0_7, %c0_8] : memref<1x128xf32, #tpu.memory_space<vmem>>, vector<1x128xf32>
      %cst_9 = arith.constant dense<0.000000e+00> : vector<128xf32>
      %13 = vector.multi_reduction <add>, %11, %cst_9 [0] : vector<16x128xf32> to vector<128xf32>
      %14 = vector.shape_cast %13 : vector<128xf32> to vector<1x128xf32>
      %15 = arith.addf %12, %14 : vector<1x128xf32>
      %c0_10 = arith.constant 0 : index
      %c0_11 = arith.constant 0 : index
      %16 = vector.load %arg9[%c0_10, %c0_11] : memref<1x128xf32, #tpu.memory_space<vmem>>, vector<1x128xf32>
      tpu.vector_store %arg9[%c0_10, %c0_11], %15 {strides = array<i32>} : memref<1x128xf32, #tpu.memory_space<vmem>>, vector<1x128xf32>,
      %c0_12 = arith.constant 0 : index
      %c0_13 = arith.constant 0 : index
      %17 = vector.load %arg10[%c0_12, %c0_13] : memref<1x128xf32, #tpu.memory_space<vmem>>, vector<1x128xf32>
      %18 = arith.mulf %11, %11 : vector<16x128xf32>
      %cst_14 = arith.constant dense<0.000000e+00> : vector<128xf32>
      %19 = vector.multi_reduction <add>, %18, %cst_14 [0] : vector<16x128xf32> to vector<128xf32>
      %20 = vector.shape_cast %19 : vector<128xf32> to vector<1x128xf32>
      %21 = arith.addf %17, %20 : vector<1x128xf32>
      %c0_15 = arith.constant 0 : index
      %c0_16 = arith.constant 0 : index
      %22 = vector.load %arg10[%c0_15, %c0_16] : memref<1x128xf32, #tpu.memory_space<vmem>>, vector<1x128xf32>
      tpu.vector_store %arg10[%c0_15, %c0_16], %21 {strides = array<i32>} : memref<1x128xf32, #tpu.memory_space<vmem>>, vector<1x128xf32>,
    } else {
    }
    %c1_i32 = arith.constant 1 : i32
    %3 = arith.cmpi eq, %arg0, %c1_i32 : i32
    %4 = arith.extui %3 : i1 to i32
    %c0_i32_1 = arith.constant 0 : i32
    %5 = arith.cmpi ne, %4, %c0_i32_1 : i32
    scf.if %5 {
      %c0 = arith.constant 0 : index
      %c0_2 = arith.constant 0 : index
      %6 = vector.load %arg2[%c0, %c0_2] : memref<16x128xbf16, #tpu.memory_space<vmem>>, vector<16x128xbf16>
      %c0_3 = arith.constant 0 : index
      %c0_4 = arith.constant 0 : index
      %7 = vector.load %arg3[%c0_3, %c0_4] : memref<128x128xbf16, #tpu.memory_space<vmem>>, vector<128x128xbf16>
      %cst = arith.constant dense<0.000000e+00> : vector<16x128xf32>
      %8 = tpu.matmul %6, %7, %cst {dimension_numbers = #tpu.dot_dimension_numbers<[1], [0], [0], [1], [0, 0, 1, 1], [], []>} : vector<16x128xbf16>, vector<128x128xbf16>, vector<16x128xf32> -> vector<16x128xf32>
      %c0_5 = arith.constant 0 : index
      %c0_6 = arith.constant 0 : index
      %9 = vector.load %arg9[%c0_5, %c0_6] : memref<1x128xf32, #tpu.memory_space<vmem>>, vector<1x128xf32>
      %cst_7 = arith.constant 6.250000e-02 : f32
      %10 = vector.broadcast %cst_7 : f32 to vector<1x128xf32>
      %11 = arith.mulf %9, %10 : vector<1x128xf32>
      %c0_8 = arith.constant 0 : index
      %c0_9 = arith.constant 0 : index
      %12 = vector.load %arg10[%c0_8, %c0_9] : memref<1x128xf32, #tpu.memory_space<vmem>>, vector<1x128xf32>
      %cst_10 = arith.constant 6.250000e-02 : f32
      %13 = vector.broadcast %cst_10 : f32 to vector<1x128xf32>
      %14 = arith.mulf %12, %13 : vector<1x128xf32>
      %15 = arith.mulf %11, %11 : vector<1x128xf32>
      %16 = arith.subf %14, %15 : vector<1x128xf32>
      %cst_11 = arith.constant 0.000000e+00 : f32
      %17 = vector.broadcast %cst_11 : f32 to vector<1x128xf32>
      %18 = arith.maximumf %16, %17 : vector<1x128xf32>
      %c0_12 = arith.constant 0 : index
      %c0_13 = arith.constant 0 : index
      %19 = vector.load %arg4[%c0_12, %c0_13] : memref<1x128xf32, #tpu.memory_space<vmem>>, vector<1x128xf32>
      %cst_14 = arith.constant 9.99999974E-6 : f32
      %20 = vector.broadcast %cst_14 : f32 to vector<1x128xf32>
      %21 = arith.addf %18, %20 : vector<1x128xf32>
      %22 = math.rsqrt %21 : vector<1x128xf32>
      %23 = arith.mulf %19, %22 : vector<1x128xf32>
      %c0_15 = arith.constant 0 : index
      %c0_16 = arith.constant 0 : index
      %24 = vector.load %arg5[%c0_15, %c0_16] : memref<1x128xf32, #tpu.memory_space<vmem>>, vector<1x128xf32>
      %25 = arith.mulf %11, %23 : vector<1x128xf32>
      %26 = arith.subf %24, %25 : vector<1x128xf32>
      %27 = vector.broadcast %23 : vector<1x128xf32> to vector<16x128xf32>
      %28 = arith.mulf %8, %27 : vector<16x128xf32>
      %29 = vector.broadcast %26 : vector<1x128xf32> to vector<16x128xf32>
      %30 = arith.addf %28, %29 : vector<16x128xf32>
      %cst_17 = arith.constant 0.000000e+00 : f32
      %31 = vector.broadcast %cst_17 : f32 to vector<16x128xf32>
      %32 = arith.maximumf %30, %31 : vector<16x128xf32>
      %33 = arith.truncf %32 : vector<16x128xf32> to vector<16x128xbf16>
      %c0_18 = arith.constant 0 : index
      %c0_19 = arith.constant 0 : index
      %34 = vector.load %arg6[%c0_18, %c0_19] : memref<128x128xbf16, #tpu.memory_space<vmem>>, vector<128x128xbf16>
      %cst_20 = arith.constant dense<0.000000e+00> : vector<16x128xf32>
      %35 = tpu.matmul %33, %34, %cst_20 {dimension_numbers = #tpu.dot_dimension_numbers<[1], [0], [0], [1], [0, 0, 1, 1], [], []>} : vector<16x128xbf16>, vector<128x128xbf16>, vector<16x128xf32> -> vector<16x128xf32>
      %c0_21 = arith.constant 0 : index
      %c0_22 = arith.constant 0 : index
      %36 = vector.load %arg7[%c0_21, %c0_22] : memref<1x128xf32, #tpu.memory_space<vmem>>, vector<1x128xf32>
      %37 = vector.broadcast %36 : vector<1x128xf32> to vector<16x128xf32>
      %38 = arith.addf %35, %37 : vector<16x128xf32>
      %c0_23 = arith.constant 0 : index
      %c0_24 = arith.constant 0 : index
      %39 = vector.load %arg8[%c0_23, %c0_24] : memref<16x128xf32, #tpu.memory_space<vmem>>, vector<16x128xf32>
      tpu.vector_store %arg8[%c0_23, %c0_24], %38 {strides = array<i32>} : memref<16x128xf32, #tpu.memory_space<vmem>>, vector<16x128xf32>,
    } else {
    }
    return
  }
  func.func @transform_0(%arg0: i32, %arg1: i32) -> (i32, i32) {
    %c0_i32 = arith.constant 0 : i32
    %c0_i32_0 = arith.constant 0 : i32
    return %arg1, %c0_i32 : i32, i32
  }
  func.func @transform_1(%arg0: i32, %arg1: i32) -> (i32, i32) {
    %c0_i32 = arith.constant 0 : i32
    %c0_i32_0 = arith.constant 0 : i32
    %c0_i32_1 = arith.constant 0 : i32
    return %c0_i32, %c0_i32_0 : i32, i32
  }
  func.func @transform_2(%arg0: i32, %arg1: i32) -> (i32, i32) {
    %c0_i32 = arith.constant 0 : i32
    %c0_i32_0 = arith.constant 0 : i32
    %c0_i32_1 = arith.constant 0 : i32
    return %c0_i32, %c0_i32_0 : i32, i32
  }
  func.func @transform_3(%arg0: i32, %arg1: i32) -> (i32, i32) {
    %c0_i32 = arith.constant 0 : i32
    %c0_i32_0 = arith.constant 0 : i32
    %c0_i32_1 = arith.constant 0 : i32
    return %c0_i32, %c0_i32_0 : i32, i32
  }
  func.func @transform_4(%arg0: i32, %arg1: i32) -> (i32, i32) {
    %c0_i32 = arith.constant 0 : i32
    %c0_i32_0 = arith.constant 0 : i32
    %c0_i32_1 = arith.constant 0 : i32
    return %c0_i32, %c0_i32_0 : i32, i32
  }
  func.func @transform_5(%arg0: i32, %arg1: i32) -> (i32, i32) {
    %c0_i32 = arith.constant 0 : i32
    %c0_i32_0 = arith.constant 0 : i32
    %c0_i32_1 = arith.constant 0 : i32
    return %c0_i32, %c0_i32_0 : i32, i32
  }
  func.func @transform_6(%arg0: i32, %arg1: i32) -> (i32, i32) {
    %0 = arith.muli %arg0, %arg1 : i32
    %c0_i32 = arith.constant 0 : i32
    %c0_i32_0 = arith.constant 0 : i32
    return %0, %c0_i32 : i32, i32
  }
}

</mosaic_0001>

<llo_original>
// kernel: tpu_custom_call.1
$region0: #{tpu_custom_call.1}
  #allocation0 [shape = 'u32[]', space=smem, size = 0x4, offset = 0x4, fixed_abs, tag = 'smem constant byte address 0x4 - core index']
  #allocation1 [shape = 'u32[72,128]{1,0:T(1,128)}', space=vmem, size = 0x9000, scoped, tag = 'internal scratch']
  #allocation2 [shape = 'f32[1,128]{1,0:T(1,128)}', space=vmem, size = 0x200, scoped, tag = 'scratch operand']
  #allocation3 [shape = 'f32[1,128]{1,0:T(1,128)}', space=vmem, size = 0x200, scoped, tag = 'scratch operand']
  %s0 = inlined_call_operand.hbm [shape: bf16[16,128], index: 0, kind: input, shape index: {}]
  %s1 = inlined_call_operand.hbm [shape: bf16[128,128], index: 1, kind: input, shape index: {}]
  %s2 = inlined_call_operand.vmem [shape: f32[1,128], index: 2, kind: input, shape index: {}]
  %s3 = inlined_call_operand.vmem [shape: f32[1,128], index: 3, kind: input, shape index: {}]
  %s4 = inlined_call_operand.hbm [shape: bf16[128,128], index: 4, kind: input, shape index: {}]
  %s5 = inlined_call_operand.vmem [shape: f32[1,128], index: 5, kind: input, shape index: {}]
  %s6 = inlined_call_operand.hbm [shape: f32[16,128], index: 6, kind: output, shape index: {}]
  %s7 = sld [smem:[#allocation0]]
  $region81: #{tpu_custom_call.1} parent=0
    _
  %s9 = ssub.s32 1, %s7
  %s10 = scalar_select 0, %s9, %s7
  $region1: #{tpu_custom_call.1} parent=0
    #allocation4 [shape = 'u8[4096]{0}', space=vmem, size = 0x1000, scoped, tag = 'input window, operand 0, single buffered']
    #allocation5 [shape = 's32[2]{0}', space=sflag, size = 0x8, scoped, tag = 'scoped memory for tpu_custom_call.1']
    #allocation6 [shape = 's32[2]{0}', space=sflag, size = 0x8, scoped, tag = 'scoped memory for tpu_custom_call.1']
    #allocation7 [shape = 'u8[32768]{0}', space=vmem, size = 0x8000, scoped, tag = 'input window, operand 1, single buffered']
    #allocation8 [shape = 's32[1]{0}', space=sflag, size = 0x4, scoped, tag = 'scoped memory for tpu_custom_call.1']
    #allocation9 [shape = 'u8[32768]{0}', space=vmem, size = 0x8000, scoped, tag = 'input window, operand 4, single buffered']
    #allocation10 [shape = 'u8[16384]{0}', space=vmem, size = 0x4000, scoped, tag = 'output window, operand 0']
    %11 = vsyncpa [#allocation5], 0
    %12 = vsyncpa [#allocation8], 0
    %13 = vsyncpa [#allocation6], 0
    %s14 = scalar_lea.sflag [#allocation6], 1
    %15 = vsyncpa %s14, 0
    loop: start=0, step=1, limit=4
    $region2: #{tpu_custom_call.1} parent=1 // loop_pre_header
      _
    $region3: #{tpu_custom_call.1} parent=1 // loop_header
      %s17 = sphi 0, %s21
      %p18 = scmp.ge.s32.totalorder %s17, 4
      %s24 = sphi 0, %s36
      %s25 = sphi 0, %s32
      %s26 = sphi 0, %s24
      %s27 = sphi 0, %s25
      %s28 = sphi 0, %s26
      %s29 = sphi 0, %s27
      %s39 = sphi 0, %s41
      %s42 = sphi 0, %s39
      %s43 = sphi 0, %s42
      %s59 = sphi 0, %s43
      %s63 = sphi 0, %s63
      %s65 = sphi 0, %s63
      %s66 = sphi 0, %s65
      %s80 = sphi 0, %s66
      %s84 = sphi 0, %s84
      %s86 = sphi 0, %s84
      %s87 = sphi 0, %s86
      %s101 = sphi 0, %s87
      %s105 = sphi 0, %s105
      %s107 = sphi 0, %s105
      %s108 = sphi 0, %s107
      %s122 = sphi 0, %s108
      %s126 = sphi 0, %s126
      %s128 = sphi 0, %s126
      %s129 = sphi 0, %s128
      %s143 = sphi 0, %s129
      %s147 = sphi 0, %s147
      %s149 = sphi 0, %s147
      %s150 = sphi 0, %s149
      %s164 = sphi 0, %s150
      %s172 = sphi 0, %s174
      %s175 = sphi 0, %s172
      %s176 = sphi 0, %s175
      %s192 = sphi 0, %s176
    $region4: #{tpu_custom_call.1} parent=1 // loop_header_branch
      %20 = sbr.rel (%p18) target = $region8
    $region5: #{tpu_custom_call.1} parent=1 // loop_body
      %s22 = ssub.s32 %s17, 1
      %s23 = ssub.s32 %s17, 2
      %s30 = sadd.s32 1, %s25
      %p31 = scmp.ge.s32.totalorder %s30, 1
      %s32 = scalar_select %p31, 0, %s30
      %s33 = sadd.s32 1, %s24
      %s34 = scalar_select %p31, %s33, %s24
      %p35 = scmp.ge.s32.totalorder %s34, 2
      %s36 = scalar_select %p35, 0, %s34
      %s37 = ssub.s32 %s25, %s32
      %p38 = scmp.eq.s32.totalorder %s37, 0
      %s40 = sadd.s32 %s39, 1
      %s41 = scalar_select %p38, %s39, %s40
      %p44 = pneg %p38
      %p45 = scmp.eq.s32.totalorder %s17, 1
      %p46 = por %p44, %p45
      %p47 = scmp.ne.s32.totalorder %s39, %s42
      %p48 = scmp.eq.s32.totalorder %s17, 0
      %p49 = por %p47, %p48
      %p50 = scmp.ne.s32.totalorder %s39, %s42
      %p51 = scmp.eq.s32.totalorder %s22, 1
      %p52 = por %p50, %p51
      %p53 = scmp.ne.s32.totalorder %s42, %s43
      %p54 = scmp.eq.s32.totalorder %s22, 0
      %p55 = por %p53, %p54
      %p56 = scmp.ne.s32.totalorder %s42, %s43
      %p57 = scmp.eq.s32.totalorder %s23, 1
      %p58 = por %p56, %p57
      %p60 = scmp.ne.s32.totalorder %s43, %s59
      %p61 = scmp.eq.s32.totalorder %s23, 0
      %p62 = por %p60, %p61
      %s64 = sadd.s32 %s63, 1
      %p67 = scmp.eq.s32.totalorder %s17, 1
      %p68 = scmp.ne.s32.totalorder %s63, %s65
      %p69 = scmp.eq.s32.totalorder %s17, 0
      %p70 = por %p68, %p69
      %p71 = scmp.ne.s32.totalorder %s63, %s65
      %p72 = scmp.eq.s32.totalorder %s22, 1
      %p73 = por %p71, %p72
      %p74 = scmp.ne.s32.totalorder %s65, %s66
      %p75 = scmp.eq.s32.totalorder %s22, 0
      %p76 = por %p74, %p75
      %p77 = scmp.ne.s32.totalorder %s65, %s66
      %p78 = scmp.eq.s32.totalorder %s23, 1
      %p79 = por %p77, %p78
      %p81 = scmp.ne.s32.totalorder %s66, %s80
      %p82 = scmp.eq.s32.totalorder %s23, 0
      %p83 = por %p81, %p82
      %s85 = sadd.s32 %s84, 1
      %p88 = scmp.eq.s32.totalorder %s17, 1
      %p89 = scmp.ne.s32.totalorder %s84, %s86
      %p90 = scmp.eq.s32.totalorder %s17, 0
      %p91 = por %p89, %p90
      %p92 = scmp.ne.s32.totalorder %s84, %s86
      %p93 = scmp.eq.s32.totalorder %s22, 1
      %p94 = por %p92, %p93
      %p95 = scmp.ne.s32.totalorder %s86, %s87
      %p96 = scmp.eq.s32.totalorder %s22, 0
      %p97 = por %p95, %p96
      %p98 = scmp.ne.s32.totalorder %s86, %s87
      %p99 = scmp.eq.s32.totalorder %s23, 1
      %p100 = por %p98, %p99
      %p102 = scmp.ne.s32.totalorder %s87, %s101
      %p103 = scmp.eq.s32.totalorder %s23, 0
      %p104 = por %p102, %p103
      %s106 = sadd.s32 %s105, 1
      %p109 = scmp.eq.s32.totalorder %s17, 1
      %p110 = scmp.ne.s32.totalorder %s105, %s107
      %p111 = scmp.eq.s32.totalorder %s17, 0
      %p112 = por %p110, %p111
      %p113 = scmp.ne.s32.totalorder %s105, %s107
      %p114 = scmp.eq.s32.totalorder %s22, 1
      %p115 = por %p113, %p114
      %p116 = scmp.ne.s32.totalorder %s107, %s108
      %p117 = scmp.eq.s32.totalorder %s22, 0
      %p118 = por %p116, %p117
      %p119 = scmp.ne.s32.totalorder %s107, %s108
      %p120 = scmp.eq.s32.totalorder %s23, 1
      %p121 = por %p119, %p120
      %p123 = scmp.ne.s32.totalorder %s108, %s122
      %p124 = scmp.eq.s32.totalorder %s23, 0
      %p125 = por %p123, %p124
      %s127 = sadd.s32 %s126, 1
      %p130 = scmp.eq.s32.totalorder %s17, 1
      %p131 = scmp.ne.s32.totalorder %s126, %s128
      %p132 = scmp.eq.s32.totalorder %s17, 0
      %p133 = por %p131, %p132
      %p134 = scmp.ne.s32.totalorder %s126, %s128
      %p135 = scmp.eq.s32.totalorder %s22, 1
      %p136 = por %p134, %p135
      %p137 = scmp.ne.s32.totalorder %s128, %s129
      %p138 = scmp.eq.s32.totalorder %s22, 0
      %p139 = por %p137, %p138
      %p140 = scmp.ne.s32.totalorder %s128, %s129
      %p141 = scmp.eq.s32.totalorder %s23, 1
      %p142 = por %p140, %p141
      %p144 = scmp.ne.s32.totalorder %s129, %s143
      %p145 = scmp.eq.s32.totalorder %s23, 0
      %p146 = por %p144, %p145
      %s148 = sadd.s32 %s147, 1
      %p151 = scmp.eq.s32.totalorder %s17, 1
      %p152 = scmp.ne.s32.totalorder %s147, %s149
      %p153 = scmp.eq.s32.totalorder %s17, 0
      %p154 = por %p152, %p153
      %p155 = scmp.ne.s32.totalorder %s147, %s149
      %p156 = scmp.eq.s32.totalorder %s22, 1
      %p157 = por %p155, %p156
      %p158 = scmp.ne.s32.totalorder %s149, %s150
      %p159 = scmp.eq.s32.totalorder %s22, 0
      %p160 = por %p158, %p159
      %p161 = scmp.ne.s32.totalorder %s149, %s150
      %p162 = scmp.eq.s32.totalorder %s23, 1
      %p163 = por %p161, %p162
      %p165 = scmp.ne.s32.totalorder %s150, %s164
      %p166 = scmp.eq.s32.totalorder %s23, 0
      %p167 = por %p165, %p166
      %s168 = smul.u32 %s24, %s25
      %s169 = smul.u32 %s36, %s32
      %s170 = ssub.s32 %s168, %s169
      %p171 = scmp.eq.s32.totalorder %s170, 0
      %s173 = sadd.s32 %s172, 1
      %s174 = scalar_select %p171, %s172, %s173
      %p177 = pneg %p171
      %p178 = scmp.eq.s32.totalorder %s17, 1
      %p179 = por %p177, %p178
      %p180 = scmp.ne.s32.totalorder %s172, %s175
      %p181 = scmp.eq.s32.totalorder %s17, 0
      %p182 = por %p180, %p181
      %p183 = scmp.ne.s32.totalorder %s172, %s175
      %p184 = scmp.eq.s32.totalorder %s22, 1
      %p185 = por %p183, %p184
      %p186 = scmp.ne.s32.totalorder %s175, %s176
      %p187 = scmp.eq.s32.totalorder %s22, 0
      %p188 = por %p186, %p187
      %p189 = scmp.ne.s32.totalorder %s175, %s176
      %p190 = scmp.eq.s32.totalorder %s23, 1
      %p191 = por %p189, %p190
      %p193 = scmp.ne.s32.totalorder %s176, %s192
      %p194 = scmp.eq.s32.totalorder %s23, 0
      %p195 = por %p193, %p194
      %p196 = scmp.le.s32.totalorder 1, %s17
      %p197 = scmp.lt.s32.totalorder %s17, 3
      %p198 = pnand %p196, %p197
      %p199 = pneg %p198
      // Predicated region
      $region9: #{tpu_custom_call.1} parent=5 // pred_check
        _
      $region10: #{tpu_custom_call.1} parent=5 // pred_check_branch
        %201 = sbr.rel (%p198) target = $region12
      $region11: #{tpu_custom_call.1} parent=5 // pred_region
        %s202 = ssub.s32 %s17, 1
        // Predicated region
        $region13: #{tpu_custom_call.1} parent=11 // pred_check
          %p203 = pneg %p55
        $region14: #{tpu_custom_call.1} parent=11 // pred_check_branch
          %205 = sbr.rel (%p203) target = $region16
        $region15: #{tpu_custom_call.1} parent=11 // pred_region
          %s206 = smul.u32 2, %s27
          %208 = vsyncadd [#allocation5], 0
          %s209 = smul.addr %s206, 4
          %s210 = scalar_lea.hbm %s0, %s209
          %s211 = sshll.u32 %s210, 4
          %s212 = int_to_ptr.hbm [resolvable:$true] %s211
          %s213 = sshll.u32 [#allocation4], 4
          %s214 = int_to_ptr.vmem [resolvable:$true] %s213
          %219 = dma.hbm_to_vmem [thread:$0]  %s212, 128, %s214, [#allocation5], 64, 64, 4
        $region16: #{tpu_custom_call.1} parent=11 // pred_fallthru
          _
        // Predicated region
        $region17: #{tpu_custom_call.1} parent=11 // pred_check
          %p220 = pneg %p76
        $region18: #{tpu_custom_call.1} parent=11 // pred_check_branch
          %222 = sbr.rel (%p220) target = $region20
        $region19: #{tpu_custom_call.1} parent=11 // pred_region
          %224 = vsyncadd [#allocation8], 0
          %s225 = sshll.u32 %s1, 4
          %s226 = int_to_ptr.hbm [resolvable:$true] %s225
          %s227 = sshll.u32 [#allocation7], 4
          %s228 = int_to_ptr.vmem [resolvable:$true] %s227
          %233 = dma.hbm_to_vmem [thread:$0]  %s226, 1024, %s228, [#allocation8], 64, 64, 4
        $region20: #{tpu_custom_call.1} parent=11 // pred_fallthru
          _
        // Predicated region
        $region21: #{tpu_custom_call.1} parent=11 // pred_check
          %p234 = pneg %p97
        $region22: #{tpu_custom_call.1} parent=11 // pred_check_branch
          %236 = sbr.rel (%p234) target = $region24
        $region23: #{tpu_custom_call.1} parent=11 // pred_region
          _
        $region24: #{tpu_custom_call.1} parent=11 // pred_fallthru
          _
        // Predicated region
        $region25: #{tpu_custom_call.1} parent=11 // pred_check
          %p237 = pneg %p118
        $region26: #{tpu_custom_call.1} parent=11 // pred_check_branch
          %239 = sbr.rel (%p237) target = $region28
        $region27: #{tpu_custom_call.1} parent=11 // pred_region
          _
        $region28: #{tpu_custom_call.1} parent=11 // pred_fallthru
          _
        // Predicated region
        $region29: #{tpu_custom_call.1} parent=11 // pred_check
          %p240 = pneg %p139
        $region30: #{tpu_custom_call.1} parent=11 // pred_check_branch
          %242 = sbr.rel (%p240) target = $region32
        $region31: #{tpu_custom_call.1} parent=11 // pred_region
          %244 = vsyncadd [#allocation8], 0
          %s245 = sshll.u32 %s4, 4
          %s246 = int_to_ptr.hbm [resolvable:$true] %s245
          %s247 = sshll.u32 [#allocation9], 4
          %s248 = int_to_ptr.vmem [resolvable:$true] %s247
          %253 = dma.hbm_to_vmem [thread:$0]  %s246, 1024, %s248, [#allocation8], 64, 64, 4
        $region32: #{tpu_custom_call.1} parent=11 // pred_fallthru
          _
        // Predicated region
        $region33: #{tpu_custom_call.1} parent=11 // pred_check
          %p254 = pneg %p160
        $region34: #{tpu_custom_call.1} parent=11 // pred_check_branch
          %256 = sbr.rel (%p254) target = $region36
        $region35: #{tpu_custom_call.1} parent=11 // pred_region
          _
        $region36: #{tpu_custom_call.1} parent=11 // pred_fallthru
          _
      $region12: #{tpu_custom_call.1} parent=5 // pred_fallthru
        _
      %p257 = scmp.lt.s32.totalorder %s17, 2
      // Predicated region
      $region37: #{tpu_custom_call.1} parent=5 // pred_check
        %p258 = pneg %p257
      $region38: #{tpu_custom_call.1} parent=5 // pred_check_branch
        %260 = sbr.rel (%p258) target = $region40
      $region39: #{tpu_custom_call.1} parent=5 // pred_region
        _
      $region40: #{tpu_custom_call.1} parent=5 // pred_fallthru
        _
      %p261 = scmp.le.s32.totalorder 1, %s17
      %p262 = scmp.lt.s32.totalorder %s17, 3
      %p263 = pnand %p261, %p262
      %p264 = pneg %p263
      // Predicated region
      $region41: #{tpu_custom_call.1} parent=5 // pred_check
        _
      $region42: #{tpu_custom_call.1} parent=5 // pred_check_branch
        %266 = sbr.rel (%p263) target = $region44
      $region43: #{tpu_custom_call.1} parent=5 // pred_region
        %s267 = ssub.s32 %s17, 1
        // Predicated region
        $region45: #{tpu_custom_call.1} parent=43 // pred_check
          %p268 = pneg %p55
        $region46: #{tpu_custom_call.1} parent=43 // pred_check_branch
          %270 = sbr.rel (%p268) target = $region48
        $region47: #{tpu_custom_call.1} parent=43 // pred_region
          %272 = dma.done [#allocation5], 128
        $region48: #{tpu_custom_call.1} parent=43 // pred_fallthru
          _
        // Predicated region
        $region49: #{tpu_custom_call.1} parent=43 // pred_check
          %p273 = pneg %p76
        $region50: #{tpu_custom_call.1} parent=43 // pred_check_branch
          %275 = sbr.rel (%p273) target = $region52
        $region51: #{tpu_custom_call.1} parent=43 // pred_region
          %277 = dma.done [#allocation8], 1024
        $region52: #{tpu_custom_call.1} parent=43 // pred_fallthru
          _
        // Predicated region
        $region53: #{tpu_custom_call.1} parent=43 // pred_check
          %p278 = pneg %p139
        $region54: #{tpu_custom_call.1} parent=43 // pred_check_branch
          %280 = sbr.rel (%p278) target = $region56
        $region55: #{tpu_custom_call.1} parent=43 // pred_region
          %282 = dma.done [#allocation8], 1024
        $region56: #{tpu_custom_call.1} parent=43 // pred_fallthru
          _
        %p283 = pneg %p55
        %p284 = pneg %p52
        %p285 = pneg %p76
        %p286 = pneg %p73
        %p287 = pneg %p97
        %p288 = pneg %p94
        %p289 = pneg %p118
        %p290 = pneg %p115
        %p291 = pneg %p139
        %p292 = pneg %p136
        %p293 = pneg %p160
        %p294 = pneg %p157
        %p295 = pneg %p188
        %p296 = pneg %p185
        %s297 = sand.u32 %s175, 1
        %s298 = scalar_lea.sflag [#allocation6], %s297
        %s299 = sand.u32 %s175, 1
        %s300 = smul.addr %s299, 16
        %s301 = scalar_lea.vmem [#allocation10], %s300
        %s302 = smul.u32 2, %s27
        %s303 = smul.u32 %s26, %s27
        %s304 = smul.u32 2, %s303
        %p305 = scmp.eq.s32.totalorder %s26, 0
        // Predicated region
        $region57: #{tpu_custom_call.1} parent=43 // pred_check
          %p306 = pneg %p305
        $region58: #{tpu_custom_call.1} parent=43 // pred_check_branch
          %308 = sbr.rel (%p306) target = $region60
        $region59: #{tpu_custom_call.1} parent=43 // pred_region
          %p309 = scmp.eq.s32.totalorder %s27, 0
          // Predicated region
          $region61: #{tpu_custom_call.1} parent=59 // pred_check
            %p310 = pneg %p309
          $region62: #{tpu_custom_call.1} parent=59 // pred_check_branch
            %312 = sbr.rel (%p310) target = $region64
          $region63: #{tpu_custom_call.1} parent=59 // pred_region
            %313 = vst [vmem:[#allocation2] sm:$0x1] 0.0
            %314 = vst [vmem:[#allocation3] sm:$0x1] 0.0
          $region64: #{tpu_custom_call.1} parent=59 // pred_fallthru
            _
          %v315 = vld [vmem:[#allocation4] sm:$0xf]
          %v316 = vld [vmem:[#allocation4 + $0x4] sm:$0xf]
          %v317 = vld [vmem:[#allocation7] sm:$0xf]
          %v318 = vld [vmem:[#allocation7 + $0x4] sm:$0xf]
          %v319 = vld [vmem:[#allocation7 + $0x8] sm:$0xf]
          %v320 = vld [vmem:[#allocation7 + $0xc] sm:$0xf]
          %v321 = vld [vmem:[#allocation7 + $0x10] sm:$0xf]
          %v322 = vld [vmem:[#allocation7 + $0x14] sm:$0xf]
          %v323 = vld [vmem:[#allocation7 + $0x18] sm:$0xf]
          %v324 = vld [vmem:[#allocation7 + $0x1c] sm:$0xf]
          %v325 = vld [vmem:[#allocation7 + $0x20] sm:$0xf]
          %v326 = vld [vmem:[#allocation7 + $0x24] sm:$0xf]
          %v327 = vld [vmem:[#allocation7 + $0x28] sm:$0xf]
          %v328 = vld [vmem:[#allocation7 + $0x2c] sm:$0xf]
          %v329 = vld [vmem:[#allocation7 + $0x30] sm:$0xf]
          %v330 = vld [vmem:[#allocation7 + $0x34] sm:$0xf]
          %v331 = vld [vmem:[#allocation7 + $0x38] sm:$0xf]
          %v332 = vld [vmem:[#allocation7 + $0x3c] sm:$0xf]
          %v335 = vunpack.c.l.b16 %v315
          %v336 = vunpack.c.l.b16 %v316
          %v337 = vpack.c.b16 %v336, %v335
          %v355 = vunpack.c.l.b16 %v317
          %v356 = vunpack.c.l.b16 %v318
          %v357 = vunpack.c.l.b16 %v319
          %v358 = vunpack.c.l.b16 %v320
          %v359 = vunpack.c.l.b16 %v321
          %v360 = vunpack.c.l.b16 %v322
          %v361 = vunpack.c.l.b16 %v323
          %v362 = vunpack.c.l.b16 %v324
          %v363 = vunpack.c.l.b16 %v325
          %v364 = vunpack.c.l.b16 %v326
          %v365 = vunpack.c.l.b16 %v327
          %v366 = vunpack.c.l.b16 %v328
          %v367 = vunpack.c.l.b16 %v329
          %v368 = vunpack.c.l.b16 %v330
          %v369 = vunpack.c.l.b16 %v331
          %v370 = vunpack.c.l.b16 %v332
          %v371 = vpack.c.b16 %v356, %v355
          %v372 = vpack.c.b16 %v358, %v357
          %v373 = vpack.c.b16 %v360, %v359
          %v374 = vpack.c.b16 %v362, %v361
          %v375 = vpack.c.b16 %v364, %v363
          %v376 = vpack.c.b16 %v366, %v365
          %v377 = vpack.c.b16 %v368, %v367
          %v378 = vpack.c.b16 %v370, %v369
          %387 = vmatpush.bf16.msra.mxu0 %v378
          %388 = vmatpush.bf16.msra.mxu0 %v377
          %389 = vmatpush.bf16.msra.mxu0 %v376
          %390 = vmatpush.bf16.msra.mxu0 %v375
          %391 = vmatpush.bf16.msra.mxu0 %v374
          %392 = vmatpush.bf16.msra.mxu0 %v373
          %393 = vmatpush.bf16.msra.mxu0 %v372
          %394 = vmatpush.bf16.msra.mxu0 %v371
          %395 = vmatmul.bf16.gmra.mxu0 %v337
          %v396 = vpop.f32.mrf.mxu0
          %v397 = vadd.f32 0.0, %v396
          %v398 = vpop.f32.mrf.mxu0
          %v399 = vadd.f32 0.0, %v398
          %400 = vdwg.mxu0
          %v401 = vld [vmem:[#allocation2] sm:$0x1]
          %v402 = vadd.f32 %v397, %v399
          %v403 = vrot.slane %v402, 4
          %v404 = vadd.f32 %v402, %v403
          %v405 = vrot.slane %v404, 2
          %v406 = vadd.f32 %v404, %v405
          %v407 = vrot.slane %v406, 1
          %v408 = vadd.f32 %v406, %v407
          %v409 = vadd.f32 %v401, %v408
          %410 = vst [vmem:[#allocation2] sm:$0x1] %v409
          %v411 = vld [vmem:[#allocation3] sm:$0x1]
          %v412 = vmul.f32 %v397, %v397
          %v413 = vmul.f32 %v399, %v399
          %v414 = vadd.f32 %v412, %v413
          %v415 = vrot.slane %v414, 4
          %v416 = vadd.f32 %v414, %v415
          %v417 = vrot.slane %v416, 2
          %v418 = vadd.f32 %v416, %v417
          %v419 = vrot.slane %v418, 1
          %v420 = vadd.f32 %v418, %v419
          %v421 = vadd.f32 %v411, %v420
          %422 = vst [vmem:[#allocation3] sm:$0x1] %v421
        $region60: #{tpu_custom_call.1} parent=43 // pred_fallthru
          _
        %p423 = scmp.eq.s32.totalorder %s26, 1
        // Predicated region
        $region65: #{tpu_custom_call.1} parent=43 // pred_check
          %p424 = pneg %p423
        $region66: #{tpu_custom_call.1} parent=43 // pred_check_branch
          %426 = sbr.rel (%p424) target = $region68
        $region67: #{tpu_custom_call.1} parent=43 // pred_region
          %v427 = vld [vmem:[#allocation4] sm:$0xf]
          %v428 = vld [vmem:[#allocation4 + $0x4] sm:$0xf]
          %v429 = vld [vmem:[#allocation7] sm:$0xf]
          %v430 = vld [vmem:[#allocation7 + $0x4] sm:$0xf]
          %v431 = vld [vmem:[#allocation7 + $0x8] sm:$0xf]
          %v432 = vld [vmem:[#allocation7 + $0xc] sm:$0xf]
          %v433 = vld [vmem:[#allocation7 + $0x10] sm:$0xf]
          %v434 = vld [vmem:[#allocation7 + $0x14] sm:$0xf]
          %v435 = vld [vmem:[#allocation7 + $0x18] sm:$0xf]
          %v436 = vld [vmem:[#allocation7 + $0x1c] sm:$0xf]
          %v437 = vld [vmem:[#allocation7 + $0x20] sm:$0xf]
          %v438 = vld [vmem:[#allocation7 + $0x24] sm:$0xf]
          %v439 = vld [vmem:[#allocation7 + $0x28] sm:$0xf]
          %v440 = vld [vmem:[#allocation7 + $0x2c] sm:$0xf]
          %v441 = vld [vmem:[#allocation7 + $0x30] sm:$0xf]
          %v442 = vld [vmem:[#allocation7 + $0x34] sm:$0xf]
          %v443 = vld [vmem:[#allocation7 + $0x38] sm:$0xf]
          %v444 = vld [vmem:[#allocation7 + $0x3c] sm:$0xf]
          %v447 = vunpack.c.l.b16 %v427
          %v448 = vunpack.c.l.b16 %v428
          %v449 = vpack.c.b16 %v448, %v447
          %v467 = vunpack.c.l.b16 %v429
          %v468 = vunpack.c.l.b16 %v430
          %v469 = vunpack.c.l.b16 %v431
          %v470 = vunpack.c.l.b16 %v432
          %v471 = vunpack.c.l.b16 %v433
          %v472 = vunpack.c.l.b16 %v434
          %v473 = vunpack.c.l.b16 %v435
          %v474 = vunpack.c.l.b16 %v436
          %v475 = vunpack.c.l.b16 %v437
          %v476 = vunpack.c.l.b16 %v438
          %v477 = vunpack.c.l.b16 %v439
          %v478 = vunpack.c.l.b16 %v440
          %v479 = vunpack.c.l.b16 %v441
          %v480 = vunpack.c.l.b16 %v442
          %v481 = vunpack.c.l.b16 %v443
          %v482 = vunpack.c.l.b16 %v444
          %v483 = vpack.c.b16 %v468, %v467
          %v484 = vpack.c.b16 %v470, %v469
          %v485 = vpack.c.b16 %v472, %v471
          %v486 = vpack.c.b16 %v474, %v473
          %v487 = vpack.c.b16 %v476, %v475
          %v488 = vpack.c.b16 %v478, %v477
          %v489 = vpack.c.b16 %v480, %v479
          %v490 = vpack.c.b16 %v482, %v481
          %499 = vmatpush.bf16.msra.mxu0 %v490
          %500 = vmatpush.bf16.msra.mxu0 %v489
          %501 = vmatpush.bf16.msra.mxu0 %v488
          %502 = vmatpush.bf16.msra.mxu0 %v487
          %503 = vmatpush.bf16.msra.mxu0 %v486
          %504 = vmatpush.bf16.msra.mxu0 %v485
          %505 = vmatpush.bf16.msra.mxu0 %v484
          %506 = vmatpush.bf16.msra.mxu0 %v483
          %507 = vmatmul.bf16.gmra.mxu0 %v449
          %v508 = vpop.f32.mrf.mxu0
          %v509 = vadd.f32 0.0, %v508
          %v510 = vpop.f32.mrf.mxu0
          %v511 = vadd.f32 0.0, %v510
          %512 = vdwg.mxu0
          %v513 = vld [vmem:[#allocation2] sm:$0x1]
          %v514 = vmul.f32 %v513, 0.0625
          %v515 = vld [vmem:[#allocation3] sm:$0x1]
          %v516 = vmul.f32 %v515, 0.0625
          %v517 = vmul.f32 %v514, %v514
          %v518 = vsub.f32 %v516, %v517
          %v519 = vmax.f32 %v518, 0.0
          %v520 = vld [vmem:[%s2] sm:$0x1]
          %v521 = vadd.f32 %v519, 1e-05
          %v522 = vrsqrt.pop %v521
          %v523 = vmul.f32 %v522, %v521
          %v524 = vmul.f32 %v523, %v522
          %v525 = vmul.f32 0.5, %v524
          %v526 = vsub.f32 1.5, %v525
          %v527 = vmul.f32 %v522, %v526
          %vm528 = vweird.f32 %v521
          %vm529 = vweird.f32 %v522
          %vm530 = vmor %vm528, %vm529
          %v531 = vsel %vm530, %v522, %v527
          %v532 = vmul.f32 %v520, %v531
          %v533 = vld [vmem:[%s3] sm:$0x1]
          %v534 = vmul.f32 %v514, %v532
          %v535 = vsub.f32 %v533, %v534
          %v537 = vperm.slane %v532, 0
          %v539 = vmul.f32 %v509, %v537
          %v540 = vmul.f32 %v511, %v537
          %v542 = vperm.slane %v535, 0
          %v544 = vadd.f32 %v539, %v542
          %v545 = vadd.f32 %v540, %v542
          %v546 = vmax.f32 %v544, 0.0
          %v547 = vmax.f32 %v545, 0.0
          %v548 = vpack.c.bf16 %v547, %v546
          %v549 = vld [vmem:[#allocation9] sm:$0xf]
          %v550 = vld [vmem:[#allocation9 + $0x4] sm:$0xf]
          %v551 = vld [vmem:[#allocation9 + $0x8] sm:$0xf]
          %v552 = vld [vmem:[#allocation9 + $0xc] sm:$0xf]
          %v553 = vld [vmem:[#allocation9 + $0x10] sm:$0xf]
          %v554 = vld [vmem:[#allocation9 + $0x14] sm:$0xf]
          %v555 = vld [vmem:[#allocation9 + $0x18] sm:$0xf]
          %v556 = vld [vmem:[#allocation9 + $0x1c] sm:$0xf]
          %v557 = vld [vmem:[#allocation9 + $0x20] sm:$0xf]
          %v558 = vld [vmem:[#allocation9 + $0x24] sm:$0xf]
          %v559 = vld [vmem:[#allocation9 + $0x28] sm:$0xf]
          %v560 = vld [vmem:[#allocation9 + $0x2c] sm:$0xf]
          %v561 = vld [vmem:[#allocation9 + $0x30] sm:$0xf]
          %v562 = vld [vmem:[#allocation9 + $0x34] sm:$0xf]
          %v563 = vld [vmem:[#allocation9 + $0x38] sm:$0xf]
          %v564 = vld [vmem:[#allocation9 + $0x3c] sm:$0xf]
          %v565 = vld [vmem:[%s5] sm:$0x1]
          %v567 = vperm.slane %v565, 0
          %v585 = vunpack.c.l.b16 %v549
          %v586 = vunpack.c.l.b16 %v550
          %v587 = vunpack.c.l.b16 %v551
          %v588 = vunpack.c.l.b16 %v552
          %v589 = vunpack.c.l.b16 %v553
          %v590 = vunpack.c.l.b16 %v554
          %v591 = vunpack.c.l.b16 %v555
          %v592 = vunpack.c.l.b16 %v556
          %v593 = vunpack.c.l.b16 %v557
          %v594 = vunpack.c.l.b16 %v558
          %v595 = vunpack.c.l.b16 %v559
          %v596 = vunpack.c.l.b16 %v560
          %v597 = vunpack.c.l.b16 %v561
          %v598 = vunpack.c.l.b16 %v562
          %v599 = vunpack.c.l.b16 %v563
          %v600 = vunpack.c.l.b16 %v564
          %v601 = vpack.c.b16 %v586, %v585
          %v602 = vpack.c.b16 %v588, %v587
          %v603 = vpack.c.b16 %v590, %v589
          %v604 = vpack.c.b16 %v592, %v591
          %v605 = vpack.c.b16 %v594, %v593
          %v606 = vpack.c.b16 %v596, %v595
          %v607 = vpack.c.b16 %v598, %v597
          %v608 = vpack.c.b16 %v600, %v599
          %617 = vmatpush.bf16.msra.mxu0 %v608
          %618 = vmatpush.bf16.msra.mxu0 %v607
          %619 = vmatpush.bf16.msra.mxu0 %v606
          %620 = vmatpush.bf16.msra.mxu0 %v605
          %621 = vmatpush.bf16.msra.mxu0 %v604
          %622 = vmatpush.bf16.msra.mxu0 %v603
          %623 = vmatpush.bf16.msra.mxu0 %v602
          %624 = vmatpush.bf16.msra.mxu0 %v601
          %625 = vmatmul.bf16.gmra.mxu0 %v548
          %v626 = vpop.f32.mrf.mxu0
          %v627 = vadd.f32 %v567, %v626
          %v628 = vpop.f32.mrf.mxu0
          %v629 = vadd.f32 %v567, %v628
          %630 = vdwg.mxu0
          %631 = vst [vmem:[%s301] sm:$0xff] %v627
          %632 = vst [vmem:[%s301 + $0x8] sm:$0xff] %v629
        $region68: #{tpu_custom_call.1} parent=43 // pred_fallthru
          _
        %s633 = sand.u32 %s175, 1
        %s634 = scalar_lea.sflag [#allocation6], %s633
        %s635 = sand.u32 %s175, 1
        %s636 = smul.addr %s635, 16
        %s637 = scalar_lea.vmem [#allocation10], %s636
        // Predicated region
        $region69: #{tpu_custom_call.1} parent=43 // pred_check
          %p638 = pneg %p185
        $region70: #{tpu_custom_call.1} parent=43 // pred_check_branch
          %640 = sbr.rel (%p638) target = $region72
        $region71: #{tpu_custom_call.1} parent=43 // pred_region
          %s641 = smul.u32 %s26, %s27
          %s642 = smul.u32 2, %s641
          %644 = vsyncadd %s634, 0
          %s645 = smul.addr %s642, 8
          %s646 = scalar_lea.hbm %s6, %s645
          %s647 = sshll.u32 %s637, 4
          %s648 = int_to_ptr.vmem [resolvable:$true] %s647
          %s649 = sshll.u32 %s646, 4
          %s650 = int_to_ptr.hbm [resolvable:$true] %s649
          %655 = dma.vmem_to_hbm [thread:$0]  %s648, 256, %s650, %s634, 128, 128, 8
        $region72: #{tpu_custom_call.1} parent=43 // pred_fallthru
          _
      $region44: #{tpu_custom_call.1} parent=5 // pred_fallthru
        _
      %p656 = scmp.le.s32.totalorder 2, %s17
      // Predicated region
      $region73: #{tpu_custom_call.1} parent=5 // pred_check
        %p657 = pneg %p656
      $region74: #{tpu_custom_call.1} parent=5 // pred_check_branch
        %659 = sbr.rel (%p657) target = $region76
      $region75: #{tpu_custom_call.1} parent=5 // pred_region
        %s660 = ssub.s32 %s17, 2
        // Predicated region
        $region77: #{tpu_custom_call.1} parent=75 // pred_check
          %p661 = pneg %p191
        $region78: #{tpu_custom_call.1} parent=75 // pred_check_branch
          %663 = sbr.rel (%p661) target = $region80
        $region79: #{tpu_custom_call.1} parent=75 // pred_region
          %s664 = sand.u32 %s176, 1
          %s665 = scalar_lea.sflag [#allocation6], %s664
          %s666 = sand.u32 %s176, 1
          %s667 = smul.addr %s666, 16
          %s668 = scalar_lea.vmem [#allocation10], %s667
          %670 = dma.done %s665, 256
        $region80: #{tpu_custom_call.1} parent=75 // pred_fallthru
          _
      $region76: #{tpu_custom_call.1} parent=5 // pred_fallthru
        _
    $region6: #{tpu_custom_call.1} parent=1 // loop_footer
      %s21 = sadd.s32 1, %s17
    $region7: #{tpu_custom_call.1} parent=1 // loop_footer_branch
      %16 = sbr.rel target = $region3
    $region8: #{tpu_custom_call.1} parent=1 // loop_exit
      _
    %671 = vsyncpa [#allocation5], 1
    %s672 = scalar_lea.sflag [#allocation5], 1
    %673 = vsyncpa %s672, 1
    %674 = vsyncpa [#allocation8], 1
    %675 = vsyncpa [#allocation6], 1
    %s676 = scalar_lea.sflag [#allocation6], 1
    %677 = vsyncpa %s676, 1

</llo_original>
